<compile_context>
chip_gen: v6e
topology: v6e:2x2x1
jax: 0.10.0
libtpu: 0.0.40
codegen_flags: <defaults>
</compile_context>

<pallas_src>
import functools

import jax
import jax.numpy as jnp
from jax.experimental import pallas as pl
from jax.experimental.pallas import tpu as pltpu


_MAX_LANES = 2048        # 512-2048 lane tiles sit at ~85%+ of HBM roofline
_MAX_FLAT_LANES = 65536  # lane cap for the flattened (1, T) fallback layout


def _round_down_128(v):
    return max(128, (v // 128) * 128)


def _vmem_limits():
    """(scoped-VMEM limit to request, tile byte budget) for this TPU generation."""
    cap = 128 * 1024 * 1024                       # v5e / v6e physical VMEM
    try:
        cap = int(pltpu.get_tpu_info().vmem_capacity_bytes)   # 64 MiB on v7x
    except Exception:
        pass
    limit = int(min(0.75 * cap, 100 * 1024 * 1024))
    return limit, int(0.8 * limit)


def _lane_tile(extent, cap_lanes):
    """Lane tile over a flattened axis: a multiple of 128 (preferring one that
    divides `extent` so every store is lane-dense), or the whole extent when it
    is shorter than one vreg row."""
    if extent <= 128:
        return extent
    cap = min(_round_down_128(cap_lanes), _round_down_128(extent))
    t = cap
    while t >= max(128, cap // 2):   # only accept an exact divisor if it stays big
        if extent % t == 0:
            return t
        t -= 128
    return cap                        # no big divisor: masked tail tile instead


def _stats_kernel(x_ref, sum_ref, sumsq_ref, acc_s, acc_sq, *, hw, lanes):
    """Per-image, per-channel sum / sum-of-squares accumulated over H*W tiles."""
    t = pl.program_id(1)

    @pl.when(t == 0)
    def _():
        acc_s[...] = jnp.zeros_like(acc_s)
        acc_sq[...] = jnp.zeros_like(acc_sq)

    x = x_ref[...].astype(jnp.float32)                         # (C, lanes)
    if hw % lanes != 0:
        # Tail tile: zero out lanes past H*W (reads there are undefined padding).
        lane_ids = jax.lax.broadcasted_iota(jnp.int32, x.shape, 1)
        x = jnp.where(lane_ids < hw - t * lanes, x, 0.0)

    # Accumulate into a narrow (C, <=128) buffer with pure VPU adds; the static,
    # 128-aligned lane slices need no relayout and no per-tile XLU reduce.
    acc_lanes = acc_s.shape[1]
    for j in range(lanes // acc_lanes):
        chunk = x[:, j * acc_lanes:(j + 1) * acc_lanes]
        acc_s[...] += chunk
        acc_sq[...] += chunk * chunk

    @pl.when(t == pl.num_programs(1) - 1)
    def _():
        # One cross-lane (XLU) reduce per image at the very end.
        sum_ref[...] = jnp.sum(acc_s[...], axis=1, keepdims=True)
        sumsq_ref[...] = jnp.sum(acc_sq[...], axis=1, keepdims=True)


def _apply_kernel(x_ref, xs_ref, scale_ref, shift_ref, y_ref, ys_ref):
    """y = x * scale + shift ; yS = xS * scale (scale/shift broadcast per block)."""
    scale = scale_ref[...]
    shift = shift_ref[...]
    if x_ref.dtype != jnp.float32:
        # Low-precision VPU path (native bf16 VALU on v6e/v7x; v5e lowers via f32).
        scale = scale.astype(x_ref.dtype)
        shift = shift.astype(x_ref.dtype)
    y_ref[...] = (x_ref[...] * scale + shift).astype(y_ref.dtype)
    ys_ref[...] = (xs_ref[...] * scale).astype(ys_ref.dtype)


def sbatchnorm2d(x, xS, running_mean, running_var, weight, bias,
                 training=True, momentum=0.1, eps=1e-5):
    """Forward of SBatchNorm2d.  x, xS are NCHW; returns ((y, yS), (new_rm, new_rv))."""
    N, C, H, W = x.shape
    HW = H * W
    M = N * HW
    dtype = x.dtype
    itemsize = jnp.dtype(dtype).itemsize

    if weight is None:                      # affine=False
        weight = jnp.ones((C,), jnp.float32)
    if bias is None:
        bias = jnp.zeros((C,), jnp.float32)

    vmem_limit, tile_budget = _vmem_limits()

    # Free views of NCHW memory (no transpose, no extra HBM passes).
    x3 = x.reshape(N, C, HW)
    xs3 = xS.reshape(N, C, HW)

    if training:
        # ---- Phase 1: per-image per-channel statistics (single read of x) ----
        # VMEM: x double-buffered (2*C*Ts*itemsize) + 2x (C,128) f32 accumulators.
        stats_cap = max(128, (tile_budget - 2 * C * 128 * 4)
                        // max(2 * C * itemsize, 1))
        Ts = _lane_tile(HW, min(stats_cap, _MAX_LANES))
        acc_lanes = 128 if Ts >= 128 else Ts

        s_n, sq_n = pl.pallas_call(
            functools.partial(_stats_kernel, hw=HW, lanes=Ts),
            grid=(N, pl.cdiv(HW, Ts)),
            in_specs=[pl.BlockSpec((None, C, Ts), lambda n, t: (n, 0, t))],
            out_specs=[pl.BlockSpec((None, C, 1), lambda n, t: (n, 0, 0)),
                       pl.BlockSpec((None, C, 1), lambda n, t: (n, 0, 0))],
            out_shape=(jax.ShapeDtypeStruct((N, C, 1), jnp.float32),
                       jax.ShapeDtypeStruct((N, C, 1), jnp.float32)),
            scratch_shapes=[pltpu.VMEM((C, acc_lanes), jnp.float32),
                            pltpu.VMEM((C, acc_lanes), jnp.float32)],
            compiler_params=pltpu.CompilerParams(
                dimension_semantics=("parallel", "arbitrary"),
                vmem_limit_bytes=vmem_limit),
            cost_estimate=pl.CostEstimate(
                flops=3 * C * M, transcendentals=0,
                bytes_accessed=C * M * itemsize),
        )(x3)

        s = jnp.sum(s_n, axis=0)[:, 0]            # (C,)
        sq = jnp.sum(sq_n, axis=0)[:, 0]
        mean = s * (1.0 / M)
        # Single-pass E[x^2]-E[x]^2 in f32 with a non-negativity guard.
        # TODO(synk): switch to two-pass / Welford if bitwise torch parity matters.
        var = jnp.maximum(sq * (1.0 / M) - mean * mean, 0.0)
        var_unbiased = var * (M / max(M - 1, 1))
    else:
        mean = running_mean.astype(jnp.float32)
        var = running_var.astype(jnp.float32)
        var_unbiased = var

    inv = jax.lax.rsqrt(var + eps)
    scale = (weight.astype(jnp.float32) * inv).reshape(C, 1)
    shift = bias.astype(jnp.float32).reshape(C, 1) - mean.reshape(C, 1) * scale

    # ---- Phase 2: apply (streams x, xS once; writes y, yS) ----
    if HW % 128 == 0:
        # Per-channel (C, T) tiles; coefficients stay as tiny (C, 1) columns.
        # VMEM: 4 streams (x, xS, y, yS) double-buffered.
        Ta = _lane_tile(HW, min(max(128, tile_budget // (8 * C * itemsize)),
                                _MAX_LANES))
        grid = (N, pl.cdiv(HW, Ta))
        data_spec = pl.BlockSpec((None, C, Ta), lambda n, t: (n, 0, t))
        coef_spec = pl.BlockSpec((C, 1), lambda n, t: (0, 0))
        in_arrays = (x3, xs3, scale, shift)
        out_shape3 = (N, C, HW)
        sems = ("parallel", "parallel")
    else:
        # H*W not a multiple of 128 (49/196/784/3136 ...): flatten each image to one
        # lane-dense row so y/yS stores are unmasked, and pre-broadcast the
        # per-channel coefficients along H*W (tiny vs. the activation streams).
        L = C * HW
        xf = x.reshape(N, 1, L)
        xsf = xS.reshape(N, 1, L)
        scale_f = jnp.broadcast_to(scale, (C, HW)).reshape(1, 1, L)
        shift_f = jnp.broadcast_to(shift, (C, HW)).reshape(1, 1, L)
        # (1, T) blocks pad to 8 sublanes in VMEM: 8 data blocks * 8*T*itemsize
        # + 4 coef blocks * 8*T*4 bytes.
        flat_cap = max(128, tile_budget // (64 * itemsize + 128))
        Ta = _lane_tile(L, min(flat_cap, _MAX_FLAT_LANES))
        # Lane-tile axis outermost so coefficient block indices are constant across
        # the inner n steps and their DMAs are elided.
        grid = (pl.cdiv(L, Ta), N)
        data_spec = pl.BlockSpec((None, 1, Ta), lambda t, n: (n, 0, t))
        coef_spec = pl.BlockSpec((None, 1, Ta), lambda t, n: (0, 0, t))
        in_arrays = (xf, xsf, scale_f, shift_f)
        out_shape3 = (N, 1, L)
        sems = ("parallel", "parallel")

    y3, ys3 = pl.pallas_call(
        _apply_kernel,
        grid=grid,
        in_specs=[data_spec, data_spec, coef_spec, coef_spec],
        out_specs=[data_spec, data_spec],
        out_shape=(jax.ShapeDtypeStruct(out_shape3, dtype),
                   jax.ShapeDtypeStruct(out_shape3, dtype)),
        compiler_params=pltpu.CompilerParams(
            dimension_semantics=sems, vmem_limit_bytes=vmem_limit),
        cost_estimate=pl.CostEstimate(
            flops=3 * C * M, transcendentals=0,
            bytes_accessed=4 * C * M * itemsize),
    )(*in_arrays)

    y = y3.reshape(N, C, H, W)
    yS = ys3.reshape(N, C, H, W)

    if training:
        new_rm = ((1.0 - momentum) * running_mean
                  + momentum * mean.astype(running_mean.dtype))
        new_rv = ((1.0 - momentum) * running_var
                  + momentum * var_unbiased.astype(running_var.dtype))
    else:
        new_rm, new_rv = running_mean, running_var
    return (y, yS), (new_rm, new_rv)


if __name__ == "__main__":
    key = jax.random.PRNGKey(0)
    kx, ks = jax.random.split(key)

    N, C, H, W = 2, 4, 16, 16
    x = jax.random.normal(kx, (N, C, H, W), dtype=jnp.float32)
    xS = jax.random.normal(ks, (N, C, H, W), dtype=jnp.float32)

    # nn.BatchNorm2d(num_features) deterministic init: weight=1, bias=0,
    # running_mean=0, running_var=1.
    weight = jnp.ones((C,), jnp.float32)
    bias = jnp.zeros((C,), jnp.float32)
    running_mean = jnp.zeros((C,), jnp.float32)
    running_var = jnp.ones((C,), jnp.float32)

    (y, yS), (new_rm, new_rv) = sbatchnorm2d(
        x, xS, running_mean, running_var, weight, bias,
        training=True, momentum=0.1, eps=1e-5)
    jax.block_until_ready((y, yS, new_rm, new_rv))

    # Pure-JAX reference (training-mode BatchNorm2d) for sanity.
    eps = 1e-5
    mean_ref = jnp.mean(x, axis=(0, 2, 3))
    var_ref = jnp.var(x, axis=(0, 2, 3))
    inv_ref = 1.0 / jnp.sqrt(var_ref + eps)
    scale_ref = (weight * inv_ref)[None, :, None, None]
    y_ref = (x - mean_ref[None, :, None, None]) * scale_ref + bias[None, :, None, None]
    yS_ref = xS * scale_ref

    Mtot = N * H * W
    var_unb_ref = var_ref * (Mtot / (Mtot - 1))
    rm_ref = 0.9 * running_mean + 0.1 * mean_ref
    rv_ref = 0.9 * running_var + 0.1 * var_unb_ref

    assert jnp.allclose(y, y_ref, atol=1e-4, rtol=1e-4)
    assert jnp.allclose(yS, yS_ref, atol=1e-4, rtol=1e-4)
    assert jnp.allclose(new_rm, rm_ref, atol=1e-5, rtol=1e-5)
    assert jnp.allclose(new_rv, rv_ref, atol=1e-4, rtol=1e-4)
    print("KERNEL_OK")
</pallas_src>

<mosaic_0001>
module attributes {stable_mosaic.version = 11 : i64} {
  func.func @_stats_kernel(%arg0: i32, %arg1: i32, %arg2: memref<1x4x256xf32, #tpu.memory_space<vmem>>, %arg3: memref<1x4x1xf32, #tpu.memory_space<vmem>>, %arg4: memref<1x4x1xf32, #tpu.memory_space<vmem>>, %arg5: memref<4x128xf32, #tpu.memory_space<vmem>>, %arg6: memref<4x128xf32, #tpu.memory_space<vmem>>) attributes {dimension_semantics = [#tpu.dimension_semantics<parallel>, #tpu.dimension_semantics<arbitrary>], iteration_bounds = array<i64: 2, 1>, scalar_prefetch = 0 : i64, scratch_operands = 2 : i64, tpu.core_type = #tpu.core_type<tc>, window_params = [{transform_indices = @transform_0, window_bounds = array<i64: 1, 4, 256>}, {transform_indices = @transform_1, window_bounds = array<i64: 1, 4, 1>}, {transform_indices = @transform_2, window_bounds = array<i64: 1, 4, 1>}]} {
    %c0_i32 = arith.constant 0 : i32
    %0 = arith.cmpi eq, %arg1, %c0_i32 : i32
    %1 = arith.extui %0 : i1 to i32
    %c0_i32_0 = arith.constant 0 : i32
    %2 = arith.cmpi ne, %1, %c0_i32_0 : i32
    scf.if %2 {
      %cst = arith.constant 0.000000e+00 : f32
      %24 = vector.broadcast %cst : f32 to vector<4x128xf32>
      %c0_21 = arith.constant 0 : index
      %c0_22 = arith.constant 0 : index
      %25 = vector.load %arg5[%c0_21, %c0_22] : memref<4x128xf32, #tpu.memory_space<vmem>>, vector<4x128xf32>
      tpu.vector_store %arg5[%c0_21, %c0_22], %24 {strides = array<i32>} : memref<4x128xf32, #tpu.memory_space<vmem>>, vector<4x128xf32>,
      %cst_23 = arith.constant 0.000000e+00 : f32
      %26 = vector.broadcast %cst_23 : f32 to vector<4x128xf32>
      %c0_24 = arith.constant 0 : index
      %c0_25 = arith.constant 0 : index
      %27 = vector.load %arg6[%c0_24, %c0_25] : memref<4x128xf32, #tpu.memory_space<vmem>>, vector<4x128xf32>
      tpu.vector_store %arg6[%c0_24, %c0_25], %26 {strides = array<i32>} : memref<4x128xf32, #tpu.memory_space<vmem>>, vector<4x128xf32>,
    } else {
    }
    %c0 = arith.constant 0 : index
    %c0_1 = arith.constant 0 : index
    %c0_2 = arith.constant 0 : index
    %3 = vector.load %arg2[%c0, %c0_1, %c0_2] : memref<1x4x256xf32, #tpu.memory_space<vmem>>, vector<1x4x256xf32>
    %4 = vector.shape_cast %3 : vector<1x4x256xf32> to vector<4x256xf32>
    %5 = vector.extract_strided_slice %4 {offsets = [0, 0], sizes = [4, 128], strides = [1, 1]} : vector<4x256xf32> to vector<4x128xf32>
    %c0_3 = arith.constant 0 : index
    %c0_4 = arith.constant 0 : index
    %6 = vector.load %arg5[%c0_3, %c0_4] : memref<4x128xf32, #tpu.memory_space<vmem>>, vector<4x128xf32>
    %7 = arith.addf %6, %5 : vector<4x128xf32>
    %c0_5 = arith.constant 0 : index
    %c0_6 = arith.constant 0 : index
    %8 = vector.load %arg5[%c0_5, %c0_6] : memref<4x128xf32, #tpu.memory_space<vmem>>, vector<4x128xf32>
    tpu.vector_store %arg5[%c0_5, %c0_6], %7 {strides = array<i32>} : memref<4x128xf32, #tpu.memory_space<vmem>>, vector<4x128xf32>,
    %c0_7 = arith.constant 0 : index
    %c0_8 = arith.constant 0 : index
    %9 = vector.load %arg6[%c0_7, %c0_8] : memref<4x128xf32, #tpu.memory_space<vmem>>, vector<4x128xf32>
    %10 = arith.mulf %5, %5 : vector<4x128xf32>
    %11 = arith.addf %9, %10 : vector<4x128xf32>
    %c0_9 = arith.constant 0 : index
    %c0_10 = arith.constant 0 : index
    %12 = vector.load %arg6[%c0_9, %c0_10] : memref<4x128xf32, #tpu.memory_space<vmem>>, vector<4x128xf32>
    tpu.vector_store %arg6[%c0_9, %c0_10], %11 {strides = array<i32>} : memref<4x128xf32, #tpu.memory_space<vmem>>, vector<4x128xf32>,
    %13 = vector.extract_strided_slice %4 {offsets = [0, 128], sizes = [4, 128], strides = [1, 1]} : vector<4x256xf32> to vector<4x128xf32>
    %c0_11 = arith.constant 0 : index
    %c0_12 = arith.constant 0 : index
    %14 = vector.load %arg5[%c0_11, %c0_12] : memref<4x128xf32, #tpu.memory_space<vmem>>, vector<4x128xf32>
    %15 = arith.addf %14, %13 : vector<4x128xf32>
    %c0_13 = arith.constant 0 : index
    %c0_14 = arith.constant 0 : index
    %16 = vector.load %arg5[%c0_13, %c0_14] : memref<4x128xf32, #tpu.memory_space<vmem>>, vector<4x128xf32>
    tpu.vector_store %arg5[%c0_13, %c0_14], %15 {strides = array<i32>} : memref<4x128xf32, #tpu.memory_space<vmem>>, vector<4x128xf32>,
    %c0_15 = arith.constant 0 : index
    %c0_16 = arith.constant 0 : index
    %17 = vector.load %arg6[%c0_15, %c0_16] : memref<4x128xf32, #tpu.memory_space<vmem>>, vector<4x128xf32>
    %18 = arith.mulf %13, %13 : vector<4x128xf32>
    %19 = arith.addf %17, %18 : vector<4x128xf32>
    %c0_17 = arith.constant 0 : index
    %c0_18 = arith.constant 0 : index
    %20 = vector.load %arg6[%c0_17, %c0_18] : memref<4x128xf32, #tpu.memory_space<vmem>>, vector<4x128xf32>
    tpu.vector_store %arg6[%c0_17, %c0_18], %19 {strides = array<i32>} : memref<4x128xf32, #tpu.memory_space<vmem>>, vector<4x128xf32>,
    %c0_i32_19 = arith.constant 0 : i32
    %21 = arith.cmpi eq, %arg1, %c0_i32_19 : i32
    %22 = arith.extui %21 : i1 to i32
    %c0_i32_20 = arith.constant 0 : i32
    %23 = arith.cmpi ne, %22, %c0_i32_20 : i32
    scf.if %23 {
      %c0_21 = arith.constant 0 : index
      %c0_22 = arith.constant 0 : index
      %24 = vector.load %arg5[%c0_21, %c0_22] : memref<4x128xf32, #tpu.memory_space<vmem>>, vector<4x128xf32>
      %cst = arith.constant dense<0.000000e+00> : vector<4xf32>
      %25 = vector.multi_reduction <add>, %24, %cst [1] : vector<4x128xf32> to vector<4xf32>
      %26 = vector.shape_cast %25 : vector<4xf32> to vector<4x1xf32>
      %c0_23 = arith.constant 0 : index
      %c0_24 = arith.constant 0 : index
      %c0_25 = arith.constant 0 : index
      %27 = vector.load %arg3[%c0_23, %c0_24, %c0_25] : memref<1x4x1xf32, #tpu.memory_space<vmem>>, vector<1x4x1xf32>
      %28 = vector.shape_cast %27 : vector<1x4x1xf32> to vector<4x1xf32>
      %29 = vector.shape_cast %26 : vector<4x1xf32> to vector<1x4x1xf32>
      tpu.vector_store %arg3[%c0_23, %c0_24, %c0_25], %29 {strides = array<i32>} : memref<1x4x1xf32, #tpu.memory_space<vmem>>, vector<1x4x1xf32>,
      %c0_26 = arith.constant 0 : index
      %c0_27 = arith.constant 0 : index
      %30 = vector.load %arg6[%c0_26, %c0_27] : memref<4x128xf32, #tpu.memory_space<vmem>>, vector<4x128xf32>
      %cst_28 = arith.constant dense<0.000000e+00> : vector<4xf32>
      %31 = vector.multi_reduction <add>, %30, %cst_28 [1] : vector<4x128xf32> to vector<4xf32>
      %32 = vector.shape_cast %31 : vector<4xf32> to vector<4x1xf32>
      %c0_29 = arith.constant 0 : index
      %c0_30 = arith.constant 0 : index
      %c0_31 = arith.constant 0 : index
      %33 = vector.load %arg4[%c0_29, %c0_30, %c0_31] : memref<1x4x1xf32, #tpu.memory_space<vmem>>, vector<1x4x1xf32>
      %34 = vector.shape_cast %33 : vector<1x4x1xf32> to vector<4x1xf32>
      %35 = vector.shape_cast %32 : vector<4x1xf32> to vector<1x4x1xf32>
      tpu.vector_store %arg4[%c0_29, %c0_30, %c0_31], %35 {strides = array<i32>} : memref<1x4x1xf32, #tpu.memory_space<vmem>>, vector<1x4x1xf32>,
    } else {
    }
    return
  }
  func.func @transform_0(%arg0: i32, %arg1: i32) -> (i32, i32, i32) {
    %c0_i32 = arith.constant 0 : i32
    %c0_i32_0 = arith.constant 0 : i32
    return %arg0, %c0_i32, %arg1 : i32, i32, i32
  }
  func.func @transform_1(%arg0: i32, %arg1: i32) -> (i32, i32, i32) {
    %c0_i32 = arith.constant 0 : i32
    %c0_i32_0 = arith.constant 0 : i32
    %c0_i32_1 = arith.constant 0 : i32
    return %arg0, %c0_i32, %c0_i32_0 : i32, i32, i32
  }
  func.func @transform_2(%arg0: i32, %arg1: i32) -> (i32, i32, i32) {
    %c0_i32 = arith.constant 0 : i32
    %c0_i32_0 = arith.constant 0 : i32
    %c0_i32_1 = arith.constant 0 : i32
    return %arg0, %c0_i32, %c0_i32_0 : i32, i32, i32
  }
}

</mosaic_0001>

<llo_original>
// kernel: tpu_custom_call.1
$region0: #{tpu_custom_call.1}
  #allocation0 [shape = 'u32[]', space=smem, size = 0x4, offset = 0x4, fixed_abs, tag = 'smem constant byte address 0x4 - core index']
  #allocation1 [shape = 'u32[144,128]{1,0:T(1,128)}', space=vmem, size = 0x12000, scoped, tag = 'internal scratch']
  #allocation2 [shape = 'f32[4,128]{1,0:T(4,128)}', space=vmem, size = 0x800, scoped, tag = 'scratch operand']
  #allocation3 [shape = 'f32[4,128]{1,0:T(4,128)}', space=vmem, size = 0x800, scoped, tag = 'scratch operand']
  %s0 = inlined_call_operand.hbm [shape: f32[2,4,256], index: 0, kind: input, shape index: {}]
  %s1 = inlined_call_operand.vmem [shape: f32[2,4,1], index: 1, kind: output, shape index: {0}]
  %s2 = inlined_call_operand.vmem [shape: f32[2,4,1], index: 2, kind: output, shape index: {1}]
  %3 = xla_tuple %s1, %s2
  %s4 = sld [smem:[#allocation0]]
  $region57: #{tpu_custom_call.1} parent=0
    _
  %s6 = ssub.s32 1, %s4
  %s7 = scalar_select 0, %s6, %s4
  $region1: #{tpu_custom_call.1} parent=0
    #allocation4 [shape = 'u8[8192]{0}', space=vmem, size = 0x2000, scoped, tag = 'input window, operand 0']
    #allocation5 [shape = 's32[2]{0}', space=sflag, size = 0x8, scoped, tag = 'scoped memory for tpu_custom_call.1']
    %8 = vsyncpa [#allocation5], 0
    %s9 = scalar_lea.sflag [#allocation5], 1
    %10 = vsyncpa %s9, 0
    loop: start=0, step=1, limit=4
    $region2: #{tpu_custom_call.1} parent=1 // loop_pre_header
      _
    $region3: #{tpu_custom_call.1} parent=1 // loop_header
      %s12 = sphi 0, %s16
      %p13 = scmp.ge.s32.totalorder %s12, 4
      %s19 = sphi 0, %s31
      %s20 = sphi 0, %s27
      %s21 = sphi 0, %s19
      %s22 = sphi 0, %s20
      %s23 = sphi 0, %s21
      %s24 = sphi 0, %s22
      %s36 = sphi 0, %s38
      %s39 = sphi 0, %s36
      %s40 = sphi 0, %s39
      %s56 = sphi 0, %s40
      %s62 = sphi 0, %s64
      %s65 = sphi 0, %s62
      %s66 = sphi 0, %s65
      %s82 = sphi 0, %s66
      %s88 = sphi 0, %s90
      %s91 = sphi 0, %s88
      %s92 = sphi 0, %s91
      %s108 = sphi 0, %s92
    $region4: #{tpu_custom_call.1} parent=1 // loop_header_branch
      %15 = sbr.rel (%p13) target = $region8
    $region5: #{tpu_custom_call.1} parent=1 // loop_body
      %s17 = ssub.s32 %s12, 1
      %s18 = ssub.s32 %s12, 2
      %s25 = sadd.s32 1, %s20
      %p26 = scmp.ge.s32.totalorder %s25, 1
      %s27 = scalar_select %p26, 0, %s25
      %s28 = sadd.s32 1, %s19
      %s29 = scalar_select %p26, %s28, %s19
      %p30 = scmp.ge.s32.totalorder %s29, 2
      %s31 = scalar_select %p30, 0, %s29
      %s32 = ssub.s32 %s19, %s31
      %s33 = ssub.s32 %s20, %s27
      %s34 = sor.u32 %s32, %s33
      %p35 = scmp.eq.s32.totalorder %s34, 0
      %s37 = sadd.s32 %s36, 1
      %s38 = scalar_select %p35, %s36, %s37
      %p41 = pneg %p35
      %p42 = scmp.eq.s32.totalorder %s12, 1
      %p43 = por %p41, %p42
      %p44 = scmp.ne.s32.totalorder %s36, %s39
      %p45 = scmp.eq.s32.totalorder %s12, 0
      %p46 = por %p44, %p45
      %p47 = scmp.ne.s32.totalorder %s36, %s39
      %p48 = scmp.eq.s32.totalorder %s17, 1
      %p49 = por %p47, %p48
      %p50 = scmp.ne.s32.totalorder %s39, %s40
      %p51 = scmp.eq.s32.totalorder %s17, 0
      %p52 = por %p50, %p51
      %p53 = scmp.ne.s32.totalorder %s39, %s40
      %p54 = scmp.eq.s32.totalorder %s18, 1
      %p55 = por %p53, %p54
      %p57 = scmp.ne.s32.totalorder %s40, %s56
      %p58 = scmp.eq.s32.totalorder %s18, 0
      %p59 = por %p57, %p58
      %s60 = ssub.s32 %s19, %s31
      %p61 = scmp.eq.s32.totalorder %s60, 0
      %s63 = sadd.s32 %s62, 1
      %s64 = scalar_select %p61, %s62, %s63
      %p67 = pneg %p61
      %p68 = scmp.eq.s32.totalorder %s12, 1
      %p69 = por %p67, %p68
      %p70 = scmp.ne.s32.totalorder %s62, %s65
      %p71 = scmp.eq.s32.totalorder %s12, 0
      %p72 = por %p70, %p71
      %p73 = scmp.ne.s32.totalorder %s62, %s65
      %p74 = scmp.eq.s32.totalorder %s17, 1
      %p75 = por %p73, %p74
      %p76 = scmp.ne.s32.totalorder %s65, %s66
      %p77 = scmp.eq.s32.totalorder %s17, 0
      %p78 = por %p76, %p77
      %p79 = scmp.ne.s32.totalorder %s65, %s66
      %p80 = scmp.eq.s32.totalorder %s18, 1
      %p81 = por %p79, %p80
      %p83 = scmp.ne.s32.totalorder %s66, %s82
      %p84 = scmp.eq.s32.totalorder %s18, 0
      %p85 = por %p83, %p84
      %s86 = ssub.s32 %s19, %s31
      %p87 = scmp.eq.s32.totalorder %s86, 0
      %s89 = sadd.s32 %s88, 1
      %s90 = scalar_select %p87, %s88, %s89
      %p93 = pneg %p87
      %p94 = scmp.eq.s32.totalorder %s12, 1
      %p95 = por %p93, %p94
      %p96 = scmp.ne.s32.totalorder %s88, %s91
      %p97 = scmp.eq.s32.totalorder %s12, 0
      %p98 = por %p96, %p97
      %p99 = scmp.ne.s32.totalorder %s88, %s91
      %p100 = scmp.eq.s32.totalorder %s17, 1
      %p101 = por %p99, %p100
      %p102 = scmp.ne.s32.totalorder %s91, %s92
      %p103 = scmp.eq.s32.totalorder %s17, 0
      %p104 = por %p102, %p103
      %p105 = scmp.ne.s32.totalorder %s91, %s92
      %p106 = scmp.eq.s32.totalorder %s18, 1
      %p107 = por %p105, %p106
      %p109 = scmp.ne.s32.totalorder %s92, %s108
      %p110 = scmp.eq.s32.totalorder %s18, 0
      %p111 = por %p109, %p110
      %p112 = scmp.le.s32.totalorder 1, %s12
      %p113 = scmp.lt.s32.totalorder %s12, 3
      %p114 = pnand %p112, %p113
      %p115 = pneg %p114
      // Predicated region
      $region9: #{tpu_custom_call.1} parent=5 // pred_check
        _
      $region10: #{tpu_custom_call.1} parent=5 // pred_check_branch
        %117 = sbr.rel (%p114) target = $region12
      $region11: #{tpu_custom_call.1} parent=5 // pred_region
        %s118 = ssub.s32 %s12, 1
      $region12: #{tpu_custom_call.1} parent=5 // pred_fallthru
        _
      %p119 = scmp.lt.s32.totalorder %s12, 2
      // Predicated region
      $region13: #{tpu_custom_call.1} parent=5 // pred_check
        %p120 = pneg %p119
      $region14: #{tpu_custom_call.1} parent=5 // pred_check_branch
        %122 = sbr.rel (%p120) target = $region16
      $region15: #{tpu_custom_call.1} parent=5 // pred_region
        // Predicated region
        $region17: #{tpu_custom_call.1} parent=15 // pred_check
          %p123 = pneg %p46
        $region18: #{tpu_custom_call.1} parent=15 // pred_check_branch
          %125 = sbr.rel (%p123) target = $region20
        $region19: #{tpu_custom_call.1} parent=15 // pred_region
          %s126 = sand.u32 %s36, 1
          %s127 = scalar_lea.sflag [#allocation5], %s126
          %s128 = sand.u32 %s36, 1
          %s129 = smul.addr %s128, 8
          %s130 = scalar_lea.vmem [#allocation4], %s129
          %s131 = smul.u32 2, %s20
          %s133 = ssub.s32 128, 128
          %134 = vsyncadd %s127, %s133
          %s135 = smul.addr %s19, 2
          %s136 = sadd.s32 %s131, %s135
          %s137 = smul.addr %s136, 64
          %s138 = scalar_lea.hbm %s0, %s137
          %s140 = sshll.u32 %s130, 4
          %s141 = int_to_ptr.vmem [resolvable:$true] %s140
          %143 = dma.hbm_to_vmem [thread:$0]  %s138, 128, %s141, %s127
        $region20: #{tpu_custom_call.1} parent=15 // pred_fallthru
          _
      $region16: #{tpu_custom_call.1} parent=5 // pred_fallthru
        _
      %p144 = scmp.le.s32.totalorder 1, %s12
      %p145 = scmp.lt.s32.totalorder %s12, 3
      %p146 = pnand %p144, %p145
      %p147 = pneg %p146
      // Predicated region
      $region21: #{tpu_custom_call.1} parent=5 // pred_check
        _
      $region22: #{tpu_custom_call.1} parent=5 // pred_check_branch
        %149 = sbr.rel (%p146) target = $region24
      $region23: #{tpu_custom_call.1} parent=5 // pred_region
        %s150 = ssub.s32 %s12, 1
        %s151 = sand.u32 %s39, 1
        %s152 = scalar_lea.sflag [#allocation5], %s151
        %s153 = sand.u32 %s39, 1
        %s154 = smul.addr %s153, 8
        %s155 = scalar_lea.vmem [#allocation4], %s154
        // Predicated region
        $region25: #{tpu_custom_call.1} parent=23 // pred_check
          %p156 = pneg %p52
        $region26: #{tpu_custom_call.1} parent=23 // pred_check_branch
          %158 = sbr.rel (%p156) target = $region28
        $region27: #{tpu_custom_call.1} parent=23 // pred_region
          %159 = dma.done %s152, 128
        $region28: #{tpu_custom_call.1} parent=23 // pred_fallthru
          _
        %s160 = sand.u32 %s39, 1
        %s161 = scalar_lea.sflag [#allocation5], %s160
        %s162 = sand.u32 %s39, 1
        %s163 = smul.addr %s162, 8
        %s164 = scalar_lea.vmem [#allocation4], %s163
        %p165 = pneg %p52
        %p166 = pneg %p49
        %p167 = pneg %p78
        %p168 = pneg %p75
        %p169 = scmp.lt.s32.totalorder %s21, 1
        %s170 = scalar_select %p169, %s21, 1
        %s171 = smul.addr %s170, 4
        %s172 = scalar_lea.vmem %s1, %s171
        %p173 = pneg %p104
        %p174 = pneg %p101
        %p175 = scmp.lt.s32.totalorder %s21, 1
        %s176 = scalar_select %p175, %s21, 1
        %s177 = smul.addr %s176, 4
        %s178 = scalar_lea.vmem %s2, %s177
        %s179 = smul.u32 2, %s22
        %p180 = scmp.lt.s32.totalorder %s21, 1
        %s181 = scalar_select %p180, %s21, 1
        %s182 = smul.addr %s181, 4
        %s183 = scalar_lea.vmem %s1, %s182
        %p184 = scmp.lt.s32.totalorder %s21, 1
        %s185 = scalar_select %p184, %s21, 1
        %s186 = smul.addr %s185, 4
        %s187 = scalar_lea.vmem %s2, %s186
        %p188 = scmp.eq.s32.totalorder %s22, 0
        // Predicated region
        $region29: #{tpu_custom_call.1} parent=23 // pred_check
          %p189 = pneg %p188
        $region30: #{tpu_custom_call.1} parent=23 // pred_check_branch
          %191 = sbr.rel (%p189) target = $region32
        $region31: #{tpu_custom_call.1} parent=23 // pred_region
          %192 = vst [vmem:[#allocation2] sm:$0xf] 0.0
          %193 = vst [vmem:[#allocation3] sm:$0xf] 0.0
        $region32: #{tpu_custom_call.1} parent=23 // pred_fallthru
          _
        %v194 = vld [vmem:[%s155] sm:$0xff]
        %v195 = vld [vmem:[#allocation2] sm:$0xf]
        %v196 = vadd.f32 %v195, %v194
        %197 = vst [vmem:[#allocation2] sm:$0xf] %v196
        %v198 = vld [vmem:[#allocation3] sm:$0xf]
        %v199 = vmul.f32 %v194, %v194
        %v200 = vadd.f32 %v198, %v199
        %201 = vst [vmem:[#allocation3] sm:$0xf] %v200
        %v202 = vld [vmem:[#allocation2] sm:$0xf]
        %v204 = vcombine.high %v194, %v194
        %v206 = vadd.f32 %v202, %v204
        %207 = vst [vmem:[#allocation2] sm:$0xf] %v206
        %v208 = vld [vmem:[#allocation3] sm:$0xf]
        %v209 = vrot.slane %v194, 4
        %v211 = vmul.f32 %v209, %v209
        %v212 = vadd.f32 %v208, %v211
        %213 = vst [vmem:[#allocation3] sm:$0xf] %v212
        // Predicated region
        $region33: #{tpu_custom_call.1} parent=23 // pred_check
          %p214 = pneg %p188
        $region34: #{tpu_custom_call.1} parent=23 // pred_check_branch
          %216 = sbr.rel (%p214) target = $region36
        $region35: #{tpu_custom_call.1} parent=23 // pred_region
          %v217 = vld [vmem:[#allocation2] sm:$0xf]
          %vm218 = vcmask 1043456
          %v219 = vsel %vm218, %v217, 0.0
          %220 = vadd.xlane.f32.xlu0 %v219
          %v221 = vpop.xlane.xlu0 %220
          %vm222 = vcmask 3072
          %223 = vst.msk [vmem:[%s183] sm:$0xf] %vm222, %v221
          %v224 = vld [vmem:[#allocation3] sm:$0xf]
          %v225 = vsel %vm218, %v224, 0.0
          %226 = vadd.xlane.f32.xlu0 %v225
          %v227 = vpop.xlane.xlu0 %226
          %228 = vst.msk [vmem:[%s187] sm:$0xf] %vm222, %v227
        $region36: #{tpu_custom_call.1} parent=23 // pred_fallthru
          _
        %p229 = scmp.lt.s32.totalorder %s21, 1
        %s230 = scalar_select %p229, %s21, 1
        %s231 = smul.addr %s230, 4
        %s232 = scalar_lea.vmem %s1, %s231
        %p233 = scmp.lt.s32.totalorder %s21, 1
        %s234 = scalar_select %p233, %s21, 1
        %s235 = smul.addr %s234, 4
        %s236 = scalar_lea.vmem %s2, %s235
        // Predicated region
        $region37: #{tpu_custom_call.1} parent=23 // pred_check
          %p237 = pneg %p75
        $region38: #{tpu_custom_call.1} parent=23 // pred_check_branch
          %239 = sbr.rel (%p237) target = $region40
        $region39: #{tpu_custom_call.1} parent=23 // pred_region
          _
        $region40: #{tpu_custom_call.1} parent=23 // pred_fallthru
          _
        // Predicated region
        $region41: #{tpu_custom_call.1} parent=23 // pred_check
          %p240 = pneg %p101
        $region42: #{tpu_custom_call.1} parent=23 // pred_check_branch
          %242 = sbr.rel (%p240) target = $region44
        $region43: #{tpu_custom_call.1} parent=23 // pred_region
          _
        $region44: #{tpu_custom_call.1} parent=23 // pred_fallthru
          _
      $region24: #{tpu_custom_call.1} parent=5 // pred_fallthru
        _
      %p243 = scmp.le.s32.totalorder 2, %s12
      // Predicated region
      $region45: #{tpu_custom_call.1} parent=5 // pred_check
        %p244 = pneg %p243
      $region46: #{tpu_custom_call.1} parent=5 // pred_check_branch
        %246 = sbr.rel (%p244) target = $region48
      $region47: #{tpu_custom_call.1} parent=5 // pred_region
        %s247 = ssub.s32 %s12, 2
        // Predicated region
        $region49: #{tpu_custom_call.1} parent=47 // pred_check
          %p248 = pneg %p81
        $region50: #{tpu_custom_call.1} parent=47 // pred_check_branch
          %250 = sbr.rel (%p248) target = $region52
        $region51: #{tpu_custom_call.1} parent=47 // pred_region
          %p251 = scmp.lt.s32.totalorder %s23, 1
          %s252 = scalar_select %p251, %s23, 1
          %s253 = smul.addr %s252, 4
          %s254 = scalar_lea.vmem %s1, %s253
        $region52: #{tpu_custom_call.1} parent=47 // pred_fallthru
          _
        // Predicated region
        $region53: #{tpu_custom_call.1} parent=47 // pred_check
          %p255 = pneg %p107
        $region54: #{tpu_custom_call.1} parent=47 // pred_check_branch
          %257 = sbr.rel (%p255) target = $region56
        $region55: #{tpu_custom_call.1} parent=47 // pred_region
          %p258 = scmp.lt.s32.totalorder %s23, 1
          %s259 = scalar_select %p258, %s23, 1
          %s260 = smul.addr %s259, 4
          %s261 = scalar_lea.vmem %s2, %s260
        $region56: #{tpu_custom_call.1} parent=47 // pred_fallthru
          _
      $region48: #{tpu_custom_call.1} parent=5 // pred_fallthru
        _
    $region6: #{tpu_custom_call.1} parent=1 // loop_footer
      %s16 = sadd.s32 1, %s12
    $region7: #{tpu_custom_call.1} parent=1 // loop_footer_branch
      %11 = sbr.rel target = $region3
    $region8: #{tpu_custom_call.1} parent=1 // loop_exit
      _
    %262 = vsyncpa [#allocation5], 1
    %s263 = scalar_lea.sflag [#allocation5], 1
    %264 = vsyncpa %s263, 1

</llo_original>
